<compile_context>
chip_gen: v7x
topology: tpu7x:2x2x1
jax: 0.10.0
libtpu: 0.0.40
codegen_flags: <defaults>
</compile_context>

<pallas_src>
import jax
import jax.numpy as jnp
from jax.experimental import pallas as pl
from jax.experimental.pallas import tpu as pltpu


def _round_up(x, m):
    return (x + m - 1) // m * m


def _cdiv(a, b):
    return (a + b - 1) // b


def _linear_kernel(x_ref, wt_ref, b_ref, o_ref):
    """One (TM, TN) tile of y = x @ W^T + b, accumulated over the K grid axis.

    x_ref : (TM, TK) f32      wt_ref: (TK, TN) f32   (pre-transposed weight)
    b_ref : (1, TN)  f32      o_ref : (TM, TN) f32   (VMEM-resident across K)
    """
    k = pl.program_id(2)

    @pl.when(k == 0)
    def _():
        o_ref[...] = jnp.zeros_like(o_ref)

    o_ref[...] += jnp.dot(x_ref[...], wt_ref[...],
                          preferred_element_type=jnp.float32)

    @pl.when(k == pl.num_programs(2) - 1)
    def _():
        o_ref[...] += b_ref[...]


# Tile-size caps (f32).  Worst case double-buffered working set at these caps
# is ~19 MiB — comfortably inside even v7x's 64 MiB physical VMEM.
_TM_MAX, _TN_MAX, _TK_MAX = 512, 512, 2048
_SMALL_FLOPS = 1 << 22  # below this a fused XLA dot+bias beats any pallas_call


def _working_set_bytes(tm, tn, tk):
    # double-buffered f32 x / W^T / out tiles + bias tiles
    return 4 * (2 * (tm * tk + tk * tn + tm * tn) + 2 * tn)


def dropout_feed_forward(x, weight, bias):
    """Forward pass of DropoutFeedForward (empty hidden layers -> one Linear).

    x:      [batch, d_in]   float32
    weight: [d_out, d_in]   float32  (PyTorch nn.Linear layout)
    bias:   [d_out]         float32
    returns [batch, d_out]  float32
    """
    batch, d_in = x.shape
    d_out, d_in_w = weight.shape
    assert d_in == d_in_w and bias.shape == (d_out,)

    flops = 2 * batch * d_out * d_in
    if flops < _SMALL_FLOPS:
        # Tiny problem: fixed kernel-launch + pad/slice HLO overhead dominates.
        return (x @ weight.T + bias).astype(jnp.float32)

    # ---- generation-aware VMEM budget ------------------------------------
    try:
        vmem_cap = pltpu.get_tpu_info().vmem_capacity_bytes
    except Exception:
        vmem_cap = 64 * 1024 * 1024  # conservative (v7x-sized) fallback
    budget = int(vmem_cap * 0.7)

    tk_max = _TK_MAX
    while _working_set_bytes(_TM_MAX, _TN_MAX, tk_max) > budget and tk_max > 128:
        tk_max //= 2

    # ---- tile sizes: grow K first; only K is zero-padded ------------------
    if d_in <= tk_max:
        tk = _round_up(d_in, 128)      # single K step in the common case
        k_pad = tk
    else:
        tk = tk_max
        k_pad = _round_up(d_in, tk)    # K (accumulated axis) must be zero-padded

    tm = min(_TM_MAX, _round_up(batch, 128))   # multiples of 128: full MXU fill
    tn = min(_TN_MAX, _round_up(d_out, 128))

    # v7x dual-TC: ensure the parallel axes yield at least 2 blocks.
    while _cdiv(batch, tm) * _cdiv(d_out, tn) < 2:
        if tn > 128:
            tn = _round_up(_cdiv(tn, 2), 128)
        elif tm > 128:
            tm = _round_up(_cdiv(tm, 2), 128)
        else:
            break

    # ---- operand prep: pad only K; one-time transpose of W to (K, N) ------
    if k_pad != d_in:
        x_in = jnp.pad(x, ((0, 0), (0, k_pad - d_in)))
        w_in = jnp.pad(weight, ((0, 0), (0, k_pad - d_in)))
    else:
        x_in, w_in = x, weight
    wt = w_in.T                         # (k_pad, d_out) canonical MXU RHS layout
    b2 = bias.reshape(1, d_out)

    grid = (_cdiv(batch, tm), _cdiv(d_out, tn), k_pad // tk)
    vmem_limit = min(budget,
                     max(32 * 1024 * 1024, 2 * _working_set_bytes(tm, tn, tk)))

    out = pl.pallas_call(
        _linear_kernel,
        out_shape=jax.ShapeDtypeStruct((batch, d_out), jnp.float32),
        grid=grid,
        in_specs=[
            pl.BlockSpec((tm, tk), lambda i, j, k: (i, k)),   # x tile
            pl.BlockSpec((tk, tn), lambda i, j, k: (k, j)),   # W^T tile
            pl.BlockSpec((1, tn), lambda i, j, k: (0, j)),    # bias tile
        ],
        out_specs=pl.BlockSpec((tm, tn), lambda i, j, k: (i, j)),
        compiler_params=pltpu.CompilerParams(
            dimension_semantics=("parallel", "parallel", "arbitrary"),
            vmem_limit_bytes=vmem_limit),
        cost_estimate=pl.CostEstimate(
            flops=2 * batch * d_out * k_pad,
            transcendentals=0,
            bytes_accessed=4 * (batch * k_pad + k_pad * d_out
                                + d_out + batch * d_out)),
    )(x_in, wt, b2)

    return out


if __name__ == "__main__":
    key = jax.random.PRNGKey(0)

    def make_layer(k, batch, d_in, d_out):
        kx, kw, kb = jax.random.split(k, 3)
        xx = jax.random.normal(kx, (batch, d_in), dtype=jnp.float32)
        limit = 1.0 / jnp.sqrt(jnp.float32(d_in))
        ww = jax.random.uniform(kw, (d_out, d_in), dtype=jnp.float32,
                                minval=-limit, maxval=limit)
        bb = jax.random.uniform(kb, (d_out,), dtype=jnp.float32,
                                minval=-limit, maxval=limit)
        return xx, ww, bb

    k1, k2 = jax.random.split(key)

    # Tiny case (module-default sized): takes the fused XLA fast path.
    x, w, b = make_layer(k1, 8, 32, 16)
    y = dropout_feed_forward(x, w, b)
    jax.block_until_ready(y)
    assert y.shape == (8, 16)
    assert jnp.allclose(y, x @ w.T + b, atol=1e-5, rtol=1e-5)

    # Moderate case: exercises the Pallas GEMM path (ragged M block, zero-padded
    # K, N split into two blocks so both v7x TensorCores get work).
    x, w, b = make_layer(k2, 200, 200, 256)
    y = dropout_feed_forward(x, w, b)
    jax.block_until_ready(y)
    y_ref = x @ w.T + b
    assert y.shape == (200, 256)
    assert jnp.allclose(y, y_ref, atol=1e-4, rtol=1e-4)

    print("KERNEL_OK")
</pallas_src>

<mosaic_0001>
module attributes {stable_mosaic.version = 11 : i64} {
  func.func @_linear_kernel(%arg0: i32, %arg1: i32, %arg2: i32, %arg3: memref<256x256xf32, #tpu.memory_space<vmem>>, %arg4: memref<256x128xf32, #tpu.memory_space<vmem>>, %arg5: memref<1x128xf32, #tpu.memory_space<vmem>>, %arg6: memref<256x128xf32, #tpu.memory_space<vmem>>) attributes {dimension_semantics = [#tpu.dimension_semantics<parallel>, #tpu.dimension_semantics<parallel>, #tpu.dimension_semantics<arbitrary>], iteration_bounds = array<i64: 1, 2, 1>, scalar_prefetch = 0 : i64, scratch_operands = 0 : i64, tpu.core_type = #tpu.core_type<tc>, window_params = [{transform_indices = @transform_0, window_bounds = array<i64: 256, 256>}, {transform_indices = @transform_1, window_bounds = array<i64: 256, 128>}, {transform_indices = @transform_2, window_bounds = array<i64: 1, 128>}, {transform_indices = @transform_3, window_bounds = array<i64: 256, 128>}]} {
    %c0_i32 = arith.constant 0 : i32
    %0 = arith.cmpi eq, %arg2, %c0_i32 : i32
    %1 = arith.extui %0 : i1 to i32
    %c0_i32_0 = arith.constant 0 : i32
    %2 = arith.cmpi ne, %1, %c0_i32_0 : i32
    scf.if %2 {
      %cst_10 = arith.constant 0.000000e+00 : f32
      %12 = vector.broadcast %cst_10 : f32 to vector<256x128xf32>
      %c0_11 = arith.constant 0 : index
      %c0_12 = arith.constant 0 : index
      %13 = vector.load %arg6[%c0_11, %c0_12] : memref<256x128xf32, #tpu.memory_space<vmem>>, vector<256x128xf32>
      tpu.vector_store %arg6[%c0_11, %c0_12], %12 {strides = array<i32>} : memref<256x128xf32, #tpu.memory_space<vmem>>, vector<256x128xf32>,
    } else {
    }
    %c0 = arith.constant 0 : index
    %c0_1 = arith.constant 0 : index
    %3 = vector.load %arg6[%c0, %c0_1] : memref<256x128xf32, #tpu.memory_space<vmem>>, vector<256x128xf32>
    %c0_2 = arith.constant 0 : index
    %c0_3 = arith.constant 0 : index
    %4 = vector.load %arg3[%c0_2, %c0_3] : memref<256x256xf32, #tpu.memory_space<vmem>>, vector<256x256xf32>
    %c0_4 = arith.constant 0 : index
    %c0_5 = arith.constant 0 : index
    %5 = vector.load %arg4[%c0_4, %c0_5] : memref<256x128xf32, #tpu.memory_space<vmem>>, vector<256x128xf32>
    %cst = arith.constant dense<0.000000e+00> : vector<256x128xf32>
    %6 = tpu.matmul %4, %5, %cst {dimension_numbers = #tpu.dot_dimension_numbers<[1], [0], [0], [1], [0, 0, 1, 1], [], []>} : vector<256x256xf32>, vector<256x128xf32>, vector<256x128xf32> -> vector<256x128xf32>
    %7 = arith.addf %3, %6 : vector<256x128xf32>
    %c0_6 = arith.constant 0 : index
    %c0_7 = arith.constant 0 : index
    %8 = vector.load %arg6[%c0_6, %c0_7] : memref<256x128xf32, #tpu.memory_space<vmem>>, vector<256x128xf32>
    tpu.vector_store %arg6[%c0_6, %c0_7], %7 {strides = array<i32>} : memref<256x128xf32, #tpu.memory_space<vmem>>, vector<256x128xf32>,
    %c0_i32_8 = arith.constant 0 : i32
    %9 = arith.cmpi eq, %arg2, %c0_i32_8 : i32
    %10 = arith.extui %9 : i1 to i32
    %c0_i32_9 = arith.constant 0 : i32
    %11 = arith.cmpi ne, %10, %c0_i32_9 : i32
    scf.if %11 {
      %c0_10 = arith.constant 0 : index
      %c0_11 = arith.constant 0 : index
      %12 = vector.load %arg6[%c0_10, %c0_11] : memref<256x128xf32, #tpu.memory_space<vmem>>, vector<256x128xf32>
      %c0_12 = arith.constant 0 : index
      %c0_13 = arith.constant 0 : index
      %13 = vector.load %arg5[%c0_12, %c0_13] : memref<1x128xf32, #tpu.memory_space<vmem>>, vector<1x128xf32>
      %14 = vector.broadcast %13 : vector<1x128xf32> to vector<256x128xf32>
      %15 = arith.addf %12, %14 : vector<256x128xf32>
      %c0_14 = arith.constant 0 : index
      %c0_15 = arith.constant 0 : index
      %16 = vector.load %arg6[%c0_14, %c0_15] : memref<256x128xf32, #tpu.memory_space<vmem>>, vector<256x128xf32>
      tpu.vector_store %arg6[%c0_14, %c0_15], %15 {strides = array<i32>} : memref<256x128xf32, #tpu.memory_space<vmem>>, vector<256x128xf32>,
    } else {
    }
    return
  }
  func.func @transform_0(%arg0: i32, %arg1: i32, %arg2: i32) -> (i32, i32) {
    %c0_i32 = arith.constant 0 : i32
    return %arg0, %arg2 : i32, i32
  }
  func.func @transform_1(%arg0: i32, %arg1: i32, %arg2: i32) -> (i32, i32) {
    %c0_i32 = arith.constant 0 : i32
    return %arg2, %arg1 : i32, i32
  }
  func.func @transform_2(%arg0: i32, %arg1: i32, %arg2: i32) -> (i32, i32) {
    %c0_i32 = arith.constant 0 : i32
    %c0_i32_0 = arith.constant 0 : i32
    return %c0_i32, %arg1 : i32, i32
  }
  func.func @transform_3(%arg0: i32, %arg1: i32, %arg2: i32) -> (i32, i32) {
    %c0_i32 = arith.constant 0 : i32
    return %arg0, %arg1 : i32, i32
  }
}

</mosaic_0001>

<llo_original>
// kernel: tpu_custom_call.1
$region0: #{tpu_custom_call.1}
  #allocation0 [shape = 'u32[]', space=smem, size = 0x4, offset = 0x4, fixed_abs, tag = 'smem constant byte address 0x4 - core index']
  #allocation1 [shape = 'u32[144,128]{1,0:T(1,128)}', space=vmem, size = 0x12000, scoped, tag = 'internal scratch']
  %s0 = inlined_call_operand.hbm [shape: f32[200,256], index: 0, kind: input, shape index: {}]
  %s1 = inlined_call_operand.hbm [shape: f32[256,256], index: 1, kind: input, shape index: {}]
  %s2 = inlined_call_operand.vmem [shape: f32[1,256], index: 2, kind: input, shape index: {}]
  %s3 = inlined_call_operand.hbm [shape: f32[200,256], index: 3, kind: output, shape index: {}]
  %s4 = sld [smem:[#allocation0]]
  $region61: #{tpu_custom_call.1} parent=0
    _
  %s6 = ssub.s32 1, %s4
  %s7 = scalar_select 0, %s6, %s4
  $region1: #{tpu_custom_call.1} parent=0
    #allocation2 [shape = 'u8[262144]{0}', space=vmem, size = 0x40000, scoped, tag = 'input window, operand 0, single buffered']
    #allocation3 [shape = 's32[2]{0}', space=sflag, size = 0x8, scoped, tag = 'scoped memory for tpu_custom_call.1']
    #allocation4 [shape = 's32[2]{0}', space=sflag, size = 0x8, scoped, tag = 'scoped memory for tpu_custom_call.1']
    #allocation5 [shape = 'u8[262144]{0}', space=vmem, size = 0x40000, scoped, tag = 'input window, operand 1']
    #allocation6 [shape = 's32[2]{0}', space=sflag, size = 0x8, scoped, tag = 'scoped memory for tpu_custom_call.1']
    #allocation7 [shape = 'u8[262144]{0}', space=vmem, size = 0x40000, scoped, tag = 'output window, operand 0']
    %8 = vsyncpa [#allocation3], 0
    %9 = vsyncpa [#allocation6], 0
    %s10 = scalar_lea.sflag [#allocation6], 1
    %11 = vsyncpa %s10, 0
    %12 = vsyncpa [#allocation4], 0
    %s13 = scalar_lea.sflag [#allocation4], 1
    %14 = vsyncpa %s13, 0
    loop: start=0, step=1, limit=4
    $region2: #{tpu_custom_call.1} parent=1 // loop_pre_header
      _
    $region3: #{tpu_custom_call.1} parent=1 // loop_header
      %s16 = sphi 0, %s20
      %p17 = scmp.ge.s32.totalorder %s16, 4
      %s23 = sphi 0, %s42
      %s24 = sphi 0, %s38
      %s25 = sphi 0, %s34
      %s26 = sphi 0, %s23
      %s27 = sphi 0, %s24
      %s28 = sphi 0, %s25
      %s29 = sphi 0, %s26
      %s30 = sphi 0, %s27
      %s31 = sphi 0, %s28
      %s47 = sphi 0, %s49
      %s50 = sphi 0, %s47
      %s51 = sphi 0, %s50
      %s67 = sphi 0, %s51
      %s75 = sphi 0, %s77
      %s78 = sphi 0, %s75
      %s79 = sphi 0, %s78
      %s95 = sphi 0, %s79
      %s101 = sphi 0, %s103
      %s104 = sphi 0, %s101
      %s105 = sphi 0, %s104
      %s121 = sphi 0, %s105
      %s129 = sphi 0, %s131
      %s132 = sphi 0, %s129
      %s133 = sphi 0, %s132
      %s149 = sphi 0, %s133
    $region4: #{tpu_custom_call.1} parent=1 // loop_header_branch
      %19 = sbr.rel (%p17) target = $region8
    $region5: #{tpu_custom_call.1} parent=1 // loop_body
      %s21 = ssub.s32 %s16, 1
      %s22 = ssub.s32 %s16, 2
      %s32 = sadd.s32 1, %s25
      %p33 = scmp.ge.s32.totalorder %s32, 1
      %s34 = scalar_select %p33, 0, %s32
      %s35 = sadd.s32 1, %s24
      %s36 = scalar_select %p33, %s35, %s24
      %p37 = scmp.ge.s32.totalorder %s36, 2
      %s38 = scalar_select %p37, 0, %s36
      %s39 = sadd.s32 1, %s23
      %s40 = scalar_select %p37, %s39, %s23
      %p41 = scmp.ge.s32.totalorder %s40, 1
      %s42 = scalar_select %p41, 0, %s40
      %s43 = ssub.s32 %s23, %s42
      %s44 = ssub.s32 %s25, %s34
      %s45 = sor.u32 %s43, %s44
      %p46 = scmp.eq.s32.totalorder %s45, 0
      %s48 = sadd.s32 %s47, 1
      %s49 = scalar_select %p46, %s47, %s48
      %p52 = pneg %p46
      %p53 = scmp.eq.s32.totalorder %s16, 1
      %p54 = por %p52, %p53
      %p55 = scmp.ne.s32.totalorder %s47, %s50
      %p56 = scmp.eq.s32.totalorder %s16, 0
      %p57 = por %p55, %p56
      %p58 = scmp.ne.s32.totalorder %s47, %s50
      %p59 = scmp.eq.s32.totalorder %s21, 1
      %p60 = por %p58, %p59
      %p61 = scmp.ne.s32.totalorder %s50, %s51
      %p62 = scmp.eq.s32.totalorder %s21, 0
      %p63 = por %p61, %p62
      %p64 = scmp.ne.s32.totalorder %s50, %s51
      %p65 = scmp.eq.s32.totalorder %s22, 1
      %p66 = por %p64, %p65
      %p68 = scmp.ne.s32.totalorder %s51, %s67
      %p69 = scmp.eq.s32.totalorder %s22, 0
      %p70 = por %p68, %p69
      %s71 = ssub.s32 %s25, %s34
      %s72 = ssub.s32 %s24, %s38
      %s73 = sor.u32 %s71, %s72
      %p74 = scmp.eq.s32.totalorder %s73, 0
      %s76 = sadd.s32 %s75, 1
      %s77 = scalar_select %p74, %s75, %s76
      %p80 = pneg %p74
      %p81 = scmp.eq.s32.totalorder %s16, 1
      %p82 = por %p80, %p81
      %p83 = scmp.ne.s32.totalorder %s75, %s78
      %p84 = scmp.eq.s32.totalorder %s16, 0
      %p85 = por %p83, %p84
      %p86 = scmp.ne.s32.totalorder %s75, %s78
      %p87 = scmp.eq.s32.totalorder %s21, 1
      %p88 = por %p86, %p87
      %p89 = scmp.ne.s32.totalorder %s78, %s79
      %p90 = scmp.eq.s32.totalorder %s21, 0
      %p91 = por %p89, %p90
      %p92 = scmp.ne.s32.totalorder %s78, %s79
      %p93 = scmp.eq.s32.totalorder %s22, 1
      %p94 = por %p92, %p93
      %p96 = scmp.ne.s32.totalorder %s79, %s95
      %p97 = scmp.eq.s32.totalorder %s22, 0
      %p98 = por %p96, %p97
      %s99 = ssub.s32 %s24, %s38
      %p100 = scmp.eq.s32.totalorder %s99, 0
      %s102 = sadd.s32 %s101, 1
      %s103 = scalar_select %p100, %s101, %s102
      %p106 = pneg %p100
      %p107 = scmp.eq.s32.totalorder %s16, 1
      %p108 = por %p106, %p107
      %p109 = scmp.ne.s32.totalorder %s101, %s104
      %p110 = scmp.eq.s32.totalorder %s16, 0
      %p111 = por %p109, %p110
      %p112 = scmp.ne.s32.totalorder %s101, %s104
      %p113 = scmp.eq.s32.totalorder %s21, 1
      %p114 = por %p112, %p113
      %p115 = scmp.ne.s32.totalorder %s104, %s105
      %p116 = scmp.eq.s32.totalorder %s21, 0
      %p117 = por %p115, %p116
      %p118 = scmp.ne.s32.totalorder %s104, %s105
      %p119 = scmp.eq.s32.totalorder %s22, 1
      %p120 = por %p118, %p119
      %p122 = scmp.ne.s32.totalorder %s105, %s121
      %p123 = scmp.eq.s32.totalorder %s22, 0
      %p124 = por %p122, %p123
      %s125 = ssub.s32 %s23, %s42
      %s126 = ssub.s32 %s24, %s38
      %s127 = sor.u32 %s125, %s126
      %p128 = scmp.eq.s32.totalorder %s127, 0
      %s130 = sadd.s32 %s129, 1
      %s131 = scalar_select %p128, %s129, %s130
      %p134 = pneg %p128
      %p135 = scmp.eq.s32.totalorder %s16, 1
      %p136 = por %p134, %p135
      %p137 = scmp.ne.s32.totalorder %s129, %s132
      %p138 = scmp.eq.s32.totalorder %s16, 0
      %p139 = por %p137, %p138
      %p140 = scmp.ne.s32.totalorder %s129, %s132
      %p141 = scmp.eq.s32.totalorder %s21, 1
      %p142 = por %p140, %p141
      %p143 = scmp.ne.s32.totalorder %s132, %s133
      %p144 = scmp.eq.s32.totalorder %s21, 0
      %p145 = por %p143, %p144
      %p146 = scmp.ne.s32.totalorder %s132, %s133
      %p147 = scmp.eq.s32.totalorder %s22, 1
      %p148 = por %p146, %p147
      %p150 = scmp.ne.s32.totalorder %s133, %s149
      %p151 = scmp.eq.s32.totalorder %s22, 0
      %p152 = por %p150, %p151
      %p153 = scmp.le.s32.totalorder 1, %s16
      %p154 = scmp.lt.s32.totalorder %s16, 3
      %p155 = pnand %p153, %p154
      %p156 = pneg %p155
      // Predicated region
      $region9: #{tpu_custom_call.1} parent=5 // pred_check
        _
      $region10: #{tpu_custom_call.1} parent=5 // pred_check_branch
        %158 = sbr.rel (%p155) target = $region12
      $region11: #{tpu_custom_call.1} parent=5 // pred_region
        %s159 = ssub.s32 %s16, 1
        // Predicated region
        $region13: #{tpu_custom_call.1} parent=11 // pred_check
          %p160 = pneg %p63
        $region14: #{tpu_custom_call.1} parent=11 // pred_check_branch
          %162 = sbr.rel (%p160) target = $region16
        $region15: #{tpu_custom_call.1} parent=11 // pred_region
          %s163 = smul.u32 32, %s26
          %s164 = smul.u32 2, %s28
          %s165 = ssub.s32 25, %s163
          %s166 = smul.u32 128, %s165
          %s167 = smul.u32 %s166, 2
          %s169 = ssub.s32 8192, %s167
          %170 = vsyncadd [#allocation3], %s169
          %p171 = scmp.ne.s32.totalorder 0, %s167
          %s172 = smul.addr %s163, 2
          %s173 = sadd.s32 %s164, %s172
          %s174 = smul.addr %s173, 128
          %s175 = scalar_lea.hbm %s0, %s174
          %s176 = smul.u32 16, %s165
          %s177 = sshll.u32 [#allocation2], 4
          %s178 = int_to_ptr.vmem [resolvable:$true] %s177
          %s179 = sshll.u32 %s176, 4
          %183 = dma.hbm_to_vmem [thread:$0]  (%p171), %s175, %s179, %s178, [#allocation3], 256, 256, 16
        $region16: #{tpu_custom_call.1} parent=11 // pred_fallthru
          _
      $region12: #{tpu_custom_call.1} parent=5 // pred_fallthru
        _
      %p184 = scmp.lt.s32.totalorder %s16, 2
      // Predicated region
      $region17: #{tpu_custom_call.1} parent=5 // pred_check
        %p185 = pneg %p184
      $region18: #{tpu_custom_call.1} parent=5 // pred_check_branch
        %187 = sbr.rel (%p185) target = $region20
      $region19: #{tpu_custom_call.1} parent=5 // pred_region
        // Predicated region
        $region21: #{tpu_custom_call.1} parent=19 // pred_check
          %p188 = pneg %p85
        $region22: #{tpu_custom_call.1} parent=19 // pred_check_branch
          %190 = sbr.rel (%p188) target = $region24
        $region23: #{tpu_custom_call.1} parent=19 // pred_region
          %s191 = sand.u32 %s75, 1
          %s192 = scalar_lea.sflag [#allocation6], %s191
          %s193 = sand.u32 %s75, 1
          %s194 = smul.addr %s193, 256
          %s195 = scalar_lea.vmem [#allocation5], %s194
          %s196 = smul.u32 32, %s25
          %s198 = ssub.s32 4096, 4096
          %199 = vsyncadd %s192, %s198
          %s200 = smul.addr %s196, 2
          %s201 = sadd.s32 %s24, %s200
          %s202 = smul.addr %s201, 128
          %s203 = scalar_lea.hbm %s1, %s202
          %s204 = sshll.u32 %s195, 4
          %s205 = int_to_ptr.vmem [resolvable:$true] %s204
          %210 = dma.hbm_to_vmem [thread:$0]  %s203, 4096, %s205, %s192, 256, 128, 8
        $region24: #{tpu_custom_call.1} parent=19 // pred_fallthru
          _
        // Predicated region
        $region25: #{tpu_custom_call.1} parent=19 // pred_check
          %p211 = pneg %p111
        $region26: #{tpu_custom_call.1} parent=19 // pred_check_branch
          %213 = sbr.rel (%p211) target = $region28
        $region27: #{tpu_custom_call.1} parent=19 // pred_region
          %p214 = scmp.lt.s32.totalorder %s24, 1
          %s215 = scalar_select %p214, %s24, 1
          %s216 = scalar_lea.vmem %s2, %s215
        $region28: #{tpu_custom_call.1} parent=19 // pred_fallthru
          _
      $region20: #{tpu_custom_call.1} parent=5 // pred_fallthru
        _
      %p217 = scmp.le.s32.totalorder 1, %s16
      %p218 = scmp.lt.s32.totalorder %s16, 3
      %p219 = pnand %p217, %p218
      %p220 = pneg %p219
      // Predicated region
      $region29: #{tpu_custom_call.1} parent=5 // pred_check
        _
      $region30: #{tpu_custom_call.1} parent=5 // pred_check_branch
        %222 = sbr.rel (%p219) target = $region32
      $region31: #{tpu_custom_call.1} parent=5 // pred_region
        %s223 = ssub.s32 %s16, 1
        // Predicated region
        $region33: #{tpu_custom_call.1} parent=31 // pred_check
          %p224 = pneg %p63
        $region34: #{tpu_custom_call.1} parent=31 // pred_check_branch
          %226 = sbr.rel (%p224) target = $region36
        $region35: #{tpu_custom_call.1} parent=31 // pred_region
          %227 = dma.done [#allocation3], 8192
        $region36: #{tpu_custom_call.1} parent=31 // pred_fallthru
          _
        %s228 = sand.u32 %s78, 1
        %s229 = scalar_lea.sflag [#allocation6], %s228
        %s230 = sand.u32 %s78, 1
        %s231 = smul.addr %s230, 256
        %s232 = scalar_lea.vmem [#allocation5], %s231
        // Predicated region
        $region37: #{tpu_custom_call.1} parent=31 // pred_check
          %p233 = pneg %p91
        $region38: #{tpu_custom_call.1} parent=31 // pred_check_branch
          %235 = sbr.rel (%p233) target = $region40
        $region39: #{tpu_custom_call.1} parent=31 // pred_region
          %236 = dma.done %s229, 4096
        $region40: #{tpu_custom_call.1} parent=31 // pred_fallthru
          _
        %p237 = pneg %p63
        %p238 = pneg %p60
        %s239 = sand.u32 %s78, 1
        %s240 = scalar_lea.sflag [#allocation6], %s239
        %s241 = sand.u32 %s78, 1
        %s242 = smul.addr %s241, 256
        %s243 = scalar_lea.vmem [#allocation5], %s242
        %p244 = pneg %p91
        %p245 = pneg %p88
        %p246 = scmp.lt.s32.totalorder %s27, 1
        %s247 = scalar_select %p246, %s27, 1
        %s248 = scalar_lea.vmem %s2, %s247
        %p249 = pneg %p117
        %p250 = pneg %p114
        %p251 = pneg %p145
        %p252 = pneg %p142
        %s253 = sand.u32 %s132, 1
        %s254 = scalar_lea.sflag [#allocation4], %s253
        %s255 = sand.u32 %s132, 1
        %s256 = smul.addr %s255, 256
        %s257 = scalar_lea.vmem [#allocation7], %s256
        %s258 = smul.u32 32, %s26
        %s259 = smul.u32 2, %s28
        %s260 = ssub.s32 25, %s258
        %s261 = smul.u32 128, %s260
        %s262 = smul.u32 %s261, 2
        %s263 = smul.u32 32, %s28
        %p264 = scmp.lt.s32.totalorder %s27, 1
        %s265 = scalar_select %p264, %s27, 1
        %s266 = scalar_lea.vmem %s2, %s265
        %s267 = smul.u32 32, %s26
        %s268 = ssub.s32 25, %s267
        %s269 = smul.u32 128, %s268
        %p270 = scmp.eq.s32.totalorder %s28, 0
        // Predicated region
        $region41: #{tpu_custom_call.1} parent=31 // pred_check
          %p271 = pneg %p270
        $region42: #{tpu_custom_call.1} parent=31 // pred_check_branch
          %273 = sbr.rel (%p271) target = $region44
        $region43: #{tpu_custom_call.1} parent=31 // pred_region
          %274 = vst [vmem:[%s257] sm:$0xff] 0.0
          %275 = vst [vmem:[%s257 + $0x8] sm:$0xff] 0.0
          %276 = vst [vmem:[%s257 + $0x10] sm:$0xff] 0.0
          %277 = vst [vmem:[%s257 + $0x18] sm:$0xff] 0.0
          %278 = vst [vmem:[%s257 + $0x20] sm:$0xff] 0.0
          %279 = vst [vmem:[%s257 + $0x28] sm:$0xff] 0.0
          %280 = vst [vmem:[%s257 + $0x30] sm:$0xff] 0.0
          %281 = vst [vmem:[%s257 + $0x38] sm:$0xff] 0.0
          %282 = vst [vmem:[%s257 + $0x40] sm:$0xff] 0.0
          %283 = vst [vmem:[%s257 + $0x48] sm:$0xff] 0.0
          %284 = vst [vmem:[%s257 + $0x50] sm:$0xff] 0.0
          %285 = vst [vmem:[%s257 + $0x58] sm:$0xff] 0.0
          %286 = vst [vmem:[%s257 + $0x60] sm:$0xff] 0.0
          %287 = vst [vmem:[%s257 + $0x68] sm:$0xff] 0.0
          %288 = vst [vmem:[%s257 + $0x70] sm:$0xff] 0.0
          %289 = vst [vmem:[%s257 + $0x78] sm:$0xff] 0.0
          %290 = vst [vmem:[%s257 + $0x80] sm:$0xff] 0.0
          %291 = vst [vmem:[%s257 + $0x88] sm:$0xff] 0.0
          %292 = vst [vmem:[%s257 + $0x90] sm:$0xff] 0.0
          %293 = vst [vmem:[%s257 + $0x98] sm:$0xff] 0.0
          %294 = vst [vmem:[%s257 + $0xa0] sm:$0xff] 0.0
          %295 = vst [vmem:[%s257 + $0xa8] sm:$0xff] 0.0
          %296 = vst [vmem:[%s257 + $0xb0] sm:$0xff] 0.0
          %297 = vst [vmem:[%s257 + $0xb8] sm:$0xff] 0.0
          %298 = vst [vmem:[%s257 + $0xc0] sm:$0xff] 0.0
          %299 = vst [vmem:[%s257 + $0xc8] sm:$0xff] 0.0
          %300 = vst [vmem:[%s257 + $0xd0] sm:$0xff] 0.0
          %301 = vst [vmem:[%s257 + $0xd8] sm:$0xff] 0.0
          %302 = vst [vmem:[%s257 + $0xe0] sm:$0xff] 0.0
          %303 = vst [vmem:[%s257 + $0xe8] sm:$0xff] 0.0
          %304 = vst [vmem:[%s257 + $0xf0] sm:$0xff] 0.0
          %305 = vst [vmem:[%s257 + $0xf8] sm:$0xff] 0.0
        $region44: #{tpu_custom_call.1} parent=31 // pred_fallthru
          _
        %v306 = vld [vmem:[%s257] sm:$0xff]
        %v307 = vld [vmem:[%s257 + $0x8] sm:$0xff]
        %v308 = vld [vmem:[%s257 + $0x10] sm:$0xff]
        %v309 = vld [vmem:[%s257 + $0x18] sm:$0xff]
        %v310 = vld [vmem:[%s257 + $0x20] sm:$0xff]
        %v311 = vld [vmem:[%s257 + $0x28] sm:$0xff]
        %v312 = vld [vmem:[%s257 + $0x30] sm:$0xff]
        %v313 = vld [vmem:[%s257 + $0x38] sm:$0xff]
        %v314 = vld [vmem:[%s257 + $0x40] sm:$0xff]
        %v315 = vld [vmem:[%s257 + $0x48] sm:$0xff]
        %v316 = vld [vmem:[%s257 + $0x50] sm:$0xff]
        %v317 = vld [vmem:[%s257 + $0x58] sm:$0xff]
        %v318 = vld [vmem:[%s257 + $0x60] sm:$0xff]
        %v319 = vld [vmem:[%s257 + $0x68] sm:$0xff]
        %v320 = vld [vmem:[%s257 + $0x70] sm:$0xff]
        %v321 = vld [vmem:[%s257 + $0x78] sm:$0xff]
        %v322 = vld [vmem:[%s257 + $0x80] sm:$0xff]
        %v323 = vld [vmem:[%s257 + $0x88] sm:$0xff]
        %v324 = vld [vmem:[%s257 + $0x90] sm:$0xff]
        %v325 = vld [vmem:[%s257 + $0x98] sm:$0xff]
        %v326 = vld [vmem:[%s257 + $0xa0] sm:$0xff]
        %v327 = vld [vmem:[%s257 + $0xa8] sm:$0xff]
        %v328 = vld [vmem:[%s257 + $0xb0] sm:$0xff]
        %v329 = vld [vmem:[%s257 + $0xb8] sm:$0xff]
        %v330 = vld [vmem:[%s257 + $0xc0] sm:$0xff]
        %v331 = vld [vmem:[%s257 + $0xc8] sm:$0xff]
        %v332 = vld [vmem:[%s257 + $0xd0] sm:$0xff]
        %v333 = vld [vmem:[%s257 + $0xd8] sm:$0xff]
        %v334 = vld [vmem:[%s257 + $0xe0] sm:$0xff]
        %v335 = vld [vmem:[%s257 + $0xe8] sm:$0xff]
        %v336 = vld [vmem:[%s257 + $0xf0] sm:$0xff]
        %v337 = vld [vmem:[%s257 + $0xf8] sm:$0xff]
        %v338 = vld [vmem:[#allocation2] sm:$0xff]
        %v339 = vld [vmem:[#allocation2 + $0x8] sm:$0xff]
        %v340 = vld [vmem:[#allocation2 + $0x10] sm:$0xff]
        %v341 = vld [vmem:[#allocation2 + $0x18] sm:$0xff]
        %v342 = vld [vmem:[#allocation2 + $0x20] sm:$0xff]
        %v343 = vld [vmem:[#allocation2 + $0x28] sm:$0xff]
        %v344 = vld [vmem:[#allocation2 + $0x30] sm:$0xff]
        %v345 = vld [vmem:[#allocation2 + $0x38] sm:$0xff]
        %v346 = vld [vmem:[#allocation2 + $0x40] sm:$0xff]
        %v347 = vld [vmem:[#allocation2 + $0x48] sm:$0xff]
        %v348 = vld [vmem:[#allocation2 + $0x50] sm:$0xff]
        %v349 = vld [vmem:[#allocation2 + $0x58] sm:$0xff]
        %v350 = vld [vmem:[#allocation2 + $0x60] sm:$0xff]
        %v351 = vld [vmem:[#allocation2 + $0x68] sm:$0xff]
        %v352 = vld [vmem:[#allocation2 + $0x70] sm:$0xff]
        %v353 = vld [vmem:[#allocation2 + $0x78] sm:$0xff]
        %v354 = vld [vmem:[#allocation2 + $0x80] sm:$0xff]
        %v355 = vld [vmem:[#allocation2 + $0x88] sm:$0xff]
        %v356 = vld [vmem:[#allocation2 + $0x90] sm:$0xff]
        %v357 = vld [vmem:[#allocation2 + $0x98] sm:$0xff]
        %v358 = vld [vmem:[#allocation2 + $0xa0] sm:$0xff]
        %v359 = vld [vmem:[#allocation2 + $0xa8] sm:$0xff]
        %v360 = vld [vmem:[#allocation2 + $0xb0] sm:$0xff]
        %v361 = vld [vmem:[#allocation2 + $0xb8] sm:$0xff]
        %v362 = vld [vmem:[#allocation2 + $0xc0] sm:$0xff]
        %v363 = vld [vmem:[#allocation2 + $0xc8] sm:$0xff]
        %v364 = vld [vmem:[#allocation2 + $0xd0] sm:$0xff]
        %v365 = vld [vmem:[#allocation2 + $0xd8] sm:$0xff]
        %v366 = vld [vmem:[#allocation2 + $0xe0] sm:$0xff]
        %v367 = vld [vmem:[#allocation2 + $0xe8] sm:$0xff]
        %v368 = vld [vmem:[#allocation2 + $0xf0] sm:$0xff]
        %v369 = vld [vmem:[#allocation2 + $0xf8] sm:$0xff]
        %v370 = vld [vmem:[#allocation2 + $0x100] sm:$0xff]
        %v371 = vld [vmem:[#allocation2 + $0x108] sm:$0xff]
        %v372 = vld [vmem:[#allocation2 + $0x110] sm:$0xff]
        %v373 = vld [vmem:[#allocation2 + $0x118] sm:$0xff]
        %v374 = vld [vmem:[#allocation2 + $0x120] sm:$0xff]
        %v375 = vld [vmem:[#allocation2 + $0x128] sm:$0xff]
        %v376 = vld [vmem:[#allocation2 + $0x130] sm:$0xff]
        %v377 = vld [vmem:[#allocation2 + $0x138] sm:$0xff]
        %v378 = vld [vmem:[#allocation2 + $0x140] sm:$0xff]
        %v379 = vld [vmem:[#allocation2 + $0x148] sm:$0xff]
        %v380 = vld [vmem:[#allocation2 + $0x150] sm:$0xff]
        %v381 = vld [vmem:[#allocation2 + $0x158] sm:$0xff]
        %v382 = vld [vmem:[#allocation2 + $0x160] sm:$0xff]
        %v383 = vld [vmem:[#allocation2 + $0x168] sm:$0xff]
        %v384 = vld [vmem:[#allocation2 + $0x170] sm:$0xff]
        %v385 = vld [vmem:[#allocation2 + $0x178] sm:$0xff]
        %v386 = vld [vmem:[#allocation2 + $0x180] sm:$0xff]
        %v387 = vld [vmem:[#allocation2 + $0x188] sm:$0xff]
        %v388 = vld [vmem:[#allocation2 + $0x190] sm:$0xff]
        %v389 = vld [vmem:[#allocation2 + $0x198] sm:$0xff]
        %v390 = vld [vmem:[#allocation2 + $0x1a0] sm:$0xff]
        %v391 = vld [vmem:[#allocation2 + $0x1a8] sm:$0xff]
        %v392 = vld [vmem:[#allocation2 + $0x1b0] sm:$0xff]
        %v393 = vld [vmem:[#allocation2 + $0x1b8] sm:$0xff]
        %v394 = vld [vmem:[#allocation2 + $0x1c0] sm:$0xff]
        %v395 = vld [vmem:[#allocation2 + $0x1c8] sm:$0xff]
        %v396 = vld [vmem:[#allocation2 + $0x1d0] sm:$0xff]
        %v397 = vld [vmem:[#allocation2 + $0x1d8] sm:$0xff]
        %v398 = vld [vmem:[#allocation2 + $0x1e0] sm:$0xff]
        %v399 = vld [vmem:[#allocation2 + $0x1e8] sm:$0xff]
        %v400 = vld [vmem:[#allocation2 + $0x1f0] sm:$0xff]
        %v401 = vld [vmem:[#allocation2 + $0x1f8] sm:$0xff]
        %v402 = vld [vmem:[%s232] sm:$0xff]
        %v403 = vld [vmem:[%s232 + $0x8] sm:$0xff]
        %v404 = vld [vmem:[%s232 + $0x10] sm:$0xff]
        %v405 = vld [vmem:[%s232 + $0x18] sm:$0xff]
        %v406 = vld [vmem:[%s232 + $0x20] sm:$0xff]
        %v407 = vld [vmem:[%s232 + $0x28] sm:$0xff]
        %v408 = vld [vmem:[%s232 + $0x30] sm:$0xff]
        %v409 = vld [vmem:[%s232 + $0x38] sm:$0xff]
        %v410 = vld [vmem:[%s232 + $0x40] sm:$0xff]
        %v411 = vld [vmem:[%s232 + $0x48] sm:$0xff]
        %v412 = vld [vmem:[%s232 + $0x50] sm:$0xff]
        %v413 = vld [vmem:[%s232 + $0x58] sm:$0xff]
        %v414 = vld [vmem:[%s232 + $0x60] sm:$0xff]
        %v415 = vld [vmem:[%s232 + $0x68] sm:$0xff]
        %v416 = vld [vmem:[%s232 + $0x70] sm:$0xff]
        %v417 = vld [vmem:[%s232 + $0x78] sm:$0xff]
        %v418 = vld [vmem:[%s232 + $0x80] sm:$0xff]
        %v419 = vld [vmem:[%s232 + $0x88] sm:$0xff]
        %v420 = vld [vmem:[%s232 + $0x90] sm:$0xff]
        %v421 = vld [vmem:[%s232 + $0x98] sm:$0xff]
        %v422 = vld [vmem:[%s232 + $0xa0] sm:$0xff]
        %v423 = vld [vmem:[%s232 + $0xa8] sm:$0xff]
        %v424 = vld [vmem:[%s232 + $0xb0] sm:$0xff]
        %v425 = vld [vmem:[%s232 + $0xb8] sm:$0xff]
        %v426 = vld [vmem:[%s232 + $0xc0] sm:$0xff]
        %v427 = vld [vmem:[%s232 + $0xc8] sm:$0xff]
        %v428 = vld [vmem:[%s232 + $0xd0] sm:$0xff]
        %v429 = vld [vmem:[%s232 + $0xd8] sm:$0xff]
        %v430 = vld [vmem:[%s232 + $0xe0] sm:$0xff]
        %v431 = vld [vmem:[%s232 + $0xe8] sm:$0xff]
        %v432 = vld [vmem:[%s232 + $0xf0] sm:$0xff]
        %v433 = vld [vmem:[%s232 + $0xf8] sm:$0xff]
        %434 = vmatprep.subr.mxu0 0.0
        %435 = vmatpush1.msra.mxu0 %v402
        %436 = vmatprep.subr.mxu0 0.0
        %437 = vmatpush1.msra.mxu0 %v403
        %438 = vmatprep.subr.mxu0 0.0
        %439 = vmatpush1.msra.mxu0 %v404
        %440 = vmatprep.subr.mxu0 0.0
        %441 = vmatpush1.msra.mxu0 %v405
        %442 = vmatprep.subr.mxu0 0.0
        %443 = vmatpush1.msra.mxu0 %v406
        %444 = vmatprep.subr.mxu0 0.0
        %445 = vmatpush1.msra.mxu0 %v407
        %446 = vmatprep.subr.mxu0 0.0
        %447 = vmatpush1.msra.mxu0 %v408
        %448 = vmatprep.subr.mxu0 0.0
        %449 = vmatpush1.msra.mxu0 %v409
        %450 = vmatprep.subr.mxu0 0.0
        %451 = vmatpush1.msra.mxu0 %v410
        %452 = vmatprep.subr.mxu0 0.0
        %453 = vmatpush1.msra.mxu0 %v411
        %454 = vmatprep.subr.mxu0 0.0
        %455 = vmatpush1.msra.mxu0 %v412
        %456 = vmatprep.subr.mxu0 0.0
        %457 = vmatpush1.msra.mxu0 %v413
        %458 = vmatprep.subr.mxu0 0.0
        %459 = vmatpush1.msra.mxu0 %v414
        %460 = vmatprep.subr.mxu0 0.0
        %461 = vmatpush1.msra.mxu0 %v415
        %462 = vmatprep.subr.mxu0 0.0
        %463 = vmatpush1.msra.mxu0 %v416
        %464 = vmatprep.subr.mxu0 0.0
        %465 = vmatpush1.msra.mxu0 %v417
        %466 = vmatprep.subr.mxu0 0.0
        %467 = vmatpush1.msra.mxu0 %v418
        %468 = vmatprep.subr.mxu0 0.0
        %469 = vmatpush1.msra.mxu0 %v419
        %470 = vmatprep.subr.mxu0 0.0
        %471 = vmatpush1.msra.mxu0 %v420
        %472 = vmatprep.subr.mxu0 0.0
        %473 = vmatpush1.msra.mxu0 %v421
        %474 = vmatprep.subr.mxu0 0.0
        %475 = vmatpush1.msra.mxu0 %v422
        %476 = vmatprep.subr.mxu0 0.0
        %477 = vmatpush1.msra.mxu0 %v423
        %478 = vmatprep.subr.mxu0 0.0
        %479 = vmatpush1.msra.mxu0 %v424
        %480 = vmatprep.subr.mxu0 0.0
        %481 = vmatpush1.msra.mxu0 %v425
        %482 = vmatprep.subr.mxu0 0.0
        %483 = vmatpush1.msra.mxu0 %v426
        %484 = vmatprep.subr.mxu0 0.0
        %485 = vmatpush1.msra.mxu0 %v427
        %486 = vmatprep.subr.mxu0 0.0
        %487 = vmatpush1.msra.mxu0 %v428
        %488 = vmatprep.subr.mxu0 0.0
        %489 = vmatpush1.msra.mxu0 %v429
        %490 = vmatprep.subr.mxu0 0.0
        %491 = vmatpush1.msra.mxu0 %v430
        %492 = vmatprep.subr.mxu0 0.0
        %493 = vmatpush1.msra.mxu0 %v431
        %494 = vmatprep.subr.mxu0 0.0
        %495 = vmatpush1.msra.mxu0 %v432
        %496 = vmatprep.subr.mxu0 0.0
        %497 = vmatpush1.msra.mxu0 %v433
        %498 = vmatprep.mubr.f32.mxu0 %v339
        %499 = vmatmul.mubr.f32.gmra.mrb[0].mxu0 %v338
        %v500 = vpop.f32.mrb[0].mxu0
        %v501 = vadd.f32 0.0, %v500
        %v502 = vpop.f32.mrb[0].mxu0
        %503 = vmatprep.mubr.f32.mxu0 %v341
        %504 = vmatmul.mubr.f32.gmra.mrb[0].mxu0 %v340
        %v505 = vpop.f32.mrb[0].mxu0
        %v506 = vadd.f32 0.0, %v505
        %v507 = vpop.f32.mrb[0].mxu0
        %508 = vmatprep.mubr.f32.mxu0 %v343
        %509 = vmatmul.mubr.f32.gmra.mrb[0].mxu0 %v342
        %v510 = vpop.f32.mrb[0].mxu0
        %v511 = vadd.f32 0.0, %v510
        %v512 = vpop.f32.mrb[0].mxu0
        %513 = vmatprep.mubr.f32.mxu0 %v345
        %514 = vmatmul.mubr.f32.gmra.mrb[0].mxu0 %v344
        %v515 = vpop.f32.mrb[0].mxu0
        %v516 = vadd.f32 0.0, %v515
        %v517 = vpop.f32.mrb[0].mxu0
        %518 = vmatprep.mubr.f32.mxu0 %v347
        %519 = vmatmul.mubr.f32.gmra.mrb[0].mxu0 %v346
        %v520 = vpop.f32.mrb[0].mxu0
        %v521 = vadd.f32 0.0, %v520
        %v522 = vpop.f32.mrb[0].mxu0
        %523 = vmatprep.mubr.f32.mxu0 %v349
        %524 = vmatmul.mubr.f32.gmra.mrb[0].mxu0 %v348
        %v525 = vpop.f32.mrb[0].mxu0
        %v526 = vadd.f32 0.0, %v525
        %v527 = vpop.f32.mrb[0].mxu0
        %528 = vmatprep.mubr.f32.mxu0 %v351
        %529 = vmatmul.mubr.f32.gmra.mrb[0].mxu0 %v350
        %v530 = vpop.f32.mrb[0].mxu0
        %v531 = vadd.f32 0.0, %v530
        %v532 = vpop.f32.mrb[0].mxu0
        %533 = vmatprep.mubr.f32.mxu0 %v353
        %534 = vmatmul.mubr.f32.gmra.mrb[0].mxu0 %v352
        %v535 = vpop.f32.mrb[0].mxu0
        %v536 = vadd.f32 0.0, %v535
        %v537 = vpop.f32.mrb[0].mxu0
        %538 = vmatprep.mubr.f32.mxu0 %v355
        %539 = vmatmul.mubr.f32.gmra.mrb[0].mxu0 %v354
        %v540 = vpop.f32.mrb[0].mxu0
        %v541 = vadd.f32 0.0, %v540
        %v542 = vpop.f32.mrb[0].mxu0
        %543 = vmatprep.mubr.f32.mxu0 %v357
        %544 = vmatmul.mubr.f32.gmra.mrb[0].mxu0 %v356
        %v545 = vpop.f32.mrb[0].mxu0
        %v546 = vadd.f32 0.0, %v545
        %v547 = vpop.f32.mrb[0].mxu0
        %548 = vmatprep.mubr.f32.mxu0 %v359
        %549 = vmatmul.mubr.f32.gmra.mrb[0].mxu0 %v358
        %v550 = vpop.f32.mrb[0].mxu0
        %v551 = vadd.f32 0.0, %v550
        %v552 = vpop.f32.mrb[0].mxu0
        %553 = vmatprep.mubr.f32.mxu0 %v361
        %554 = vmatmul.mubr.f32.gmra.mrb[0].mxu0 %v360
        %v555 = vpop.f32.mrb[0].mxu0
        %v556 = vadd.f32 0.0, %v555
        %v557 = vpop.f32.mrb[0].mxu0
        %558 = vmatprep.mubr.f32.mxu0 %v363
        %559 = vmatmul.mubr.f32.gmra.mrb[0].mxu0 %v362
        %v560 = vpop.f32.mrb[0].mxu0
        %v561 = vadd.f32 0.0, %v560
        %v562 = vpop.f32.mrb[0].mxu0
        %563 = vmatprep.mubr.f32.mxu0 %v365
        %564 = vmatmul.mubr.f32.gmra.mrb[0].mxu0 %v364
        %v565 = vpop.f32.mrb[0].mxu0
        %v566 = vadd.f32 0.0, %v565
        %v567 = vpop.f32.mrb[0].mxu0
        %568 = vmatprep.mubr.f32.mxu0 %v367
        %569 = vmatmul.mubr.f32.gmra.mrb[0].mxu0 %v366
        %v570 = vpop.f32.mrb[0].mxu0
        %v571 = vadd.f32 0.0, %v570
        %v572 = vpop.f32.mrb[0].mxu0
        %573 = vmatprep.mubr.f32.mxu0 %v369
        %574 = vmatmul.mubr.f32.gmra.mrb[0].mxu0 %v368
        %v575 = vpop.f32.mrb[0].mxu0
        %v576 = vadd.f32 0.0, %v575
        %v577 = vpop.f32.mrb[0].mxu0
        %578 = vmatprep.mubr.f32.mxu0 %v371
        %579 = vmatmul.mubr.f32.gmra.mrb[0].mxu0 %v370
        %v580 = vpop.f32.mrb[0].mxu0
        %v581 = vadd.f32 0.0, %v580
        %v582 = vpop.f32.mrb[0].mxu0
        %583 = vmatprep.mubr.f32.mxu0 %v373
        %584 = vmatmul.mubr.f32.gmra.mrb[0].mxu0 %v372
        %v585 = vpop.f32.mrb[0].mxu0
        %v586 = vadd.f32 0.0, %v585
        %v587 = vpop.f32.mrb[0].mxu0
        %588 = vmatprep.mubr.f32.mxu0 %v375
        %589 = vmatmul.mubr.f32.gmra.mrb[0].mxu0 %v374
        %v590 = vpop.f32.mrb[0].mxu0
        %v591 = vadd.f32 0.0, %v590
        %v592 = vpop.f32.mrb[0].mxu0
        %593 = vmatprep.mubr.f32.mxu0 %v377
        %594 = vmatmul.mubr.f32.gmra.mrb[0].mxu0 %v376
        %v595 = vpop.f32.mrb[0].mxu0
        %v596 = vadd.f32 0.0, %v595
        %v597 = vpop.f32.mrb[0].mxu0
        %598 = vmatprep.mubr.f32.mxu0 %v379
        %599 = vmatmul.mubr.f32.gmra.mrb[0].mxu0 %v378
        %v600 = vpop.f32.mrb[0].mxu0
        %v601 = vadd.f32 0.0, %v600
        %v602 = vpop.f32.mrb[0].mxu0
        %603 = vmatprep.mubr.f32.mxu0 %v381
        %604 = vmatmul.mubr.f32.gmra.mrb[0].mxu0 %v380
        %v605 = vpop.f32.mrb[0].mxu0
        %v606 = vadd.f32 0.0, %v605
        %v607 = vpop.f32.mrb[0].mxu0
        %608 = vmatprep.mubr.f32.mxu0 %v383
        %609 = vmatmul.mubr.f32.gmra.mrb[0].mxu0 %v382
        %v610 = vpop.f32.mrb[0].mxu0
        %v611 = vadd.f32 0.0, %v610
        %v612 = vpop.f32.mrb[0].mxu0
        %613 = vmatprep.mubr.f32.mxu0 %v385
        %614 = vmatmul.mubr.f32.gmra.mrb[0].mxu0 %v384
        %v615 = vpop.f32.mrb[0].mxu0
        %v616 = vadd.f32 0.0, %v615
        %v617 = vpop.f32.mrb[0].mxu0
        %618 = vmatprep.mubr.f32.mxu0 %v387
        %619 = vmatmul.mubr.f32.gmra.mrb[0].mxu0 %v386
        %v620 = vpop.f32.mrb[0].mxu0
        %v621 = vadd.f32 0.0, %v620
        %v622 = vpop.f32.mrb[0].mxu0
        %623 = vmatprep.mubr.f32.mxu0 %v389
        %624 = vmatmul.mubr.f32.gmra.mrb[0].mxu0 %v388
        %v625 = vpop.f32.mrb[0].mxu0
        %v626 = vadd.f32 0.0, %v625
        %v627 = vpop.f32.mrb[0].mxu0
        %628 = vmatprep.mubr.f32.mxu0 %v391
        %629 = vmatmul.mubr.f32.gmra.mrb[0].mxu0 %v390
        %v630 = vpop.f32.mrb[0].mxu0
        %v631 = vadd.f32 0.0, %v630
        %v632 = vpop.f32.mrb[0].mxu0
        %633 = vmatprep.mubr.f32.mxu0 %v393
        %634 = vmatmul.mubr.f32.gmra.mrb[0].mxu0 %v392
        %v635 = vpop.f32.mrb[0].mxu0
        %v636 = vadd.f32 0.0, %v635
        %v637 = vpop.f32.mrb[0].mxu0
        %638 = vmatprep.mubr.f32.mxu0 %v395
        %639 = vmatmul.mubr.f32.gmra.mrb[0].mxu0 %v394
        %v640 = vpop.f32.mrb[0].mxu0
        %v641 = vadd.f32 0.0, %v640
        %v642 = vpop.f32.mrb[0].mxu0
        %643 = vmatprep.mubr.f32.mxu0 %v397
        %644 = vmatmul.mubr.f32.gmra.mrb[0].mxu0 %v396
        %v645 = vpop.f32.mrb[0].mxu0
        %v646 = vadd.f32 0.0, %v645
        %v647 = vpop.f32.mrb[0].mxu0
        %648 = vmatprep.mubr.f32.mxu0 %v399
        %649 = vmatmul.mubr.f32.gmra.mrb[0].mxu0 %v398
        %v650 = vpop.f32.mrb[0].mxu0
        %v651 = vadd.f32 0.0, %v650
        %v652 = vpop.f32.mrb[0].mxu0
        %653 = vmatprep.mubr.f32.mxu0 %v401
        %654 = vmatmul.mubr.f32.gmra.mrb[0].mxu0 %v400
        %v655 = vpop.f32.mrb[0].mxu0
        %v656 = vadd.f32 0.0, %v655
        %v657 = vpop.f32.mrb[0].mxu0
        %658 = vdwg.mxu0
        %v659 = vadd.f32 %v306, %v501
        %v660 = vadd.f32 %v307, %v506
        %v661 = vadd.f32 %v308, %v511
        %v662 = vadd.f32 %v309, %v516
        %v663 = vadd.f32 %v310, %v521
        %v664 = vadd.f32 %v311, %v526
        %v665 = vadd.f32 %v312, %v531
        %v666 = vadd.f32 %v313, %v536
        %v667 = vadd.f32 %v314, %v541
        %v668 = vadd.f32 %v315, %v546
        %v669 = vadd.f32 %v316, %v551
        %v670 = vadd.f32 %v317, %v556
        %v671 = vadd.f32 %v318, %v561
        %v672 = vadd.f32 %v319, %v566
        %v673 = vadd.f32 %v320, %v571
        %v674 = vadd.f32 %v321, %v576
        %v675 = vadd.f32 %v322, %v581
        %v676 = vadd.f32 %v323, %v586
        %v677 = vadd.f32 %v324, %v591
        %v678 = vadd.f32 %v325, %v596
        %v679 = vadd.f32 %v326, %v601
        %v680 = vadd.f32 %v327, %v606
        %v681 = vadd.f32 %v328, %v611
        %v682 = vadd.f32 %v329, %v616
        %v683 = vadd.f32 %v330, %v621
        %v684 = vadd.f32 %v331, %v626
        %v685 = vadd.f32 %v332, %v631
        %v686 = vadd.f32 %v333, %v636
        %v687 = vadd.f32 %v334, %v641
        %v688 = vadd.f32 %v335, %v646
        %v689 = vadd.f32 %v336, %v651
        %v690 = vadd.f32 %v337, %v656
        %691 = vst [vmem:[%s257] sm:$0xff] %v659
        %692 = vst [vmem:[%s257 + $0x8] sm:$0xff] %v660
        %693 = vst [vmem:[%s257 + $0x10] sm:$0xff] %v661
        %694 = vst [vmem:[%s257 + $0x18] sm:$0xff] %v662
        %695 = vst [vmem:[%s257 + $0x20] sm:$0xff] %v663
        %696 = vst [vmem:[%s257 + $0x28] sm:$0xff] %v664
        %697 = vst [vmem:[%s257 + $0x30] sm:$0xff] %v665
        %698 = vst [vmem:[%s257 + $0x38] sm:$0xff] %v666
        %699 = vst [vmem:[%s257 + $0x40] sm:$0xff] %v667
        %700 = vst [vmem:[%s257 + $0x48] sm:$0xff] %v668
        %701 = vst [vmem:[%s257 + $0x50] sm:$0xff] %v669
        %702 = vst [vmem:[%s257 + $0x58] sm:$0xff] %v670
        %703 = vst [vmem:[%s257 + $0x60] sm:$0xff] %v671
        %704 = vst [vmem:[%s257 + $0x68] sm:$0xff] %v672
        %705 = vst [vmem:[%s257 + $0x70] sm:$0xff] %v673
        %706 = vst [vmem:[%s257 + $0x78] sm:$0xff] %v674
        %707 = vst [vmem:[%s257 + $0x80] sm:$0xff] %v675
        %708 = vst [vmem:[%s257 + $0x88] sm:$0xff] %v676
        %709 = vst [vmem:[%s257 + $0x90] sm:$0xff] %v677
        %710 = vst [vmem:[%s257 + $0x98] sm:$0xff] %v678
        %711 = vst [vmem:[%s257 + $0xa0] sm:$0xff] %v679
        %712 = vst [vmem:[%s257 + $0xa8] sm:$0xff] %v680
        %713 = vst [vmem:[%s257 + $0xb0] sm:$0xff] %v681
        %714 = vst [vmem:[%s257 + $0xb8] sm:$0xff] %v682
        %715 = vst [vmem:[%s257 + $0xc0] sm:$0xff] %v683
        %716 = vst [vmem:[%s257 + $0xc8] sm:$0xff] %v684
        %717 = vst [vmem:[%s257 + $0xd0] sm:$0xff] %v685
        %718 = vst [vmem:[%s257 + $0xd8] sm:$0xff] %v686
        %719 = vst [vmem:[%s257 + $0xe0] sm:$0xff] %v687
        %720 = vst [vmem:[%s257 + $0xe8] sm:$0xff] %v688
        %721 = vst [vmem:[%s257 + $0xf0] sm:$0xff] %v689
        %722 = vst [vmem:[%s257 + $0xf8] sm:$0xff] %v690
        // Predicated region
        $region45: #{tpu_custom_call.1} parent=31 // pred_check
          %p723 = pneg %p270
        $region46: #{tpu_custom_call.1} parent=31 // pred_check_branch
          %725 = sbr.rel (%p723) target = $region48
        $region47: #{tpu_custom_call.1} parent=31 // pred_region
          %v726 = vld [vmem:[%s257] sm:$0xff]
          %v727 = vld [vmem:[%s257 + $0x8] sm:$0xff]
          %v728 = vld [vmem:[%s257 + $0x10] sm:$0xff]
          %v729 = vld [vmem:[%s257 + $0x18] sm:$0xff]
          %v730 = vld [vmem:[%s257 + $0x20] sm:$0xff]
          %v731 = vld [vmem:[%s257 + $0x28] sm:$0xff]
          %v732 = vld [vmem:[%s257 + $0x30] sm:$0xff]
          %v733 = vld [vmem:[%s257 + $0x38] sm:$0xff]
          %v734 = vld [vmem:[%s257 + $0x40] sm:$0xff]
          %v735 = vld [vmem:[%s257 + $0x48] sm:$0xff]
          %v736 = vld [vmem:[%s257 + $0x50] sm:$0xff]
          %v737 = vld [vmem:[%s257 + $0x58] sm:$0xff]
          %v738 = vld [vmem:[%s257 + $0x60] sm:$0xff]
          %v739 = vld [vmem:[%s257 + $0x68] sm:$0xff]
          %v740 = vld [vmem:[%s257 + $0x70] sm:$0xff]
          %v741 = vld [vmem:[%s257 + $0x78] sm:$0xff]
          %v742 = vld [vmem:[%s257 + $0x80] sm:$0xff]
          %v743 = vld [vmem:[%s257 + $0x88] sm:$0xff]
          %v744 = vld [vmem:[%s257 + $0x90] sm:$0xff]
          %v745 = vld [vmem:[%s257 + $0x98] sm:$0xff]
          %v746 = vld [vmem:[%s257 + $0xa0] sm:$0xff]
          %v747 = vld [vmem:[%s257 + $0xa8] sm:$0xff]
          %v748 = vld [vmem:[%s257 + $0xb0] sm:$0xff]
          %v749 = vld [vmem:[%s257 + $0xb8] sm:$0xff]
          %v750 = vld [vmem:[%s257 + $0xc0] sm:$0xff]
          %v751 = vld [vmem:[%s257 + $0xc8] sm:$0xff]
          %v752 = vld [vmem:[%s257 + $0xd0] sm:$0xff]
          %v753 = vld [vmem:[%s257 + $0xd8] sm:$0xff]
          %v754 = vld [vmem:[%s257 + $0xe0] sm:$0xff]
          %v755 = vld [vmem:[%s257 + $0xe8] sm:$0xff]
          %v756 = vld [vmem:[%s257 + $0xf0] sm:$0xff]
          %v757 = vld [vmem:[%s257 + $0xf8] sm:$0xff]
          %v758 = vld [vmem:[%s266] sm:$0x1]
          %v760 = vlaneseq
          %v761 = vshrl.u32 %v760, 7
          %v762 = vsub.s32 0, %v761
          %v763 = vrot.slane %v758, %v762
          %v765 = vadd.f32 %v726, %v763
          %v766 = vadd.f32 %v727, %v763
          %v767 = vadd.f32 %v728, %v763
          %v768 = vadd.f32 %v729, %v763
          %v769 = vadd.f32 %v730, %v763
          %v770 = vadd.f32 %v731, %v763
          %v771 = vadd.f32 %v732, %v763
          %v772 = vadd.f32 %v733, %v763
          %v773 = vadd.f32 %v734, %v763
          %v774 = vadd.f32 %v735, %v763
          %v775 = vadd.f32 %v736, %v763
          %v776 = vadd.f32 %v737, %v763
          %v777 = vadd.f32 %v738, %v763
          %v778 = vadd.f32 %v739, %v763
          %v779 = vadd.f32 %v740, %v763
          %v780 = vadd.f32 %v741, %v763
          %v781 = vadd.f32 %v742, %v763
          %v782 = vadd.f32 %v743, %v763
          %v783 = vadd.f32 %v744, %v763
          %v784 = vadd.f32 %v745, %v763
          %v785 = vadd.f32 %v746, %v763
          %v786 = vadd.f32 %v747, %v763
          %v787 = vadd.f32 %v748, %v763
          %v788 = vadd.f32 %v749, %v763
          %v789 = vadd.f32 %v750, %v763
          %v790 = vadd.f32 %v751, %v763
          %v791 = vadd.f32 %v752, %v763
          %v792 = vadd.f32 %v753, %v763
          %v793 = vadd.f32 %v754, %v763
          %v794 = vadd.f32 %v755, %v763
          %v795 = vadd.f32 %v756, %v763
          %v796 = vadd.f32 %v757, %v763
          %797 = vst [vmem:[%s257] sm:$0xff] %v765
          %798 = vst [vmem:[%s257 + $0x8] sm:$0xff] %v766
          %799 = vst [vmem:[%s257 + $0x10] sm:$0xff] %v767
          %800 = vst [vmem:[%s257 + $0x18] sm:$0xff] %v768
          %801 = vst [vmem:[%s257 + $0x20] sm:$0xff] %v769
          %802 = vst [vmem:[%s257 + $0x28] sm:$0xff] %v770
          %803 = vst [vmem:[%s257 + $0x30] sm:$0xff] %v771
          %804 = vst [vmem:[%s257 + $0x38] sm:$0xff] %v772
          %805 = vst [vmem:[%s257 + $0x40] sm:$0xff] %v773
          %806 = vst [vmem:[%s257 + $0x48] sm:$0xff] %v774
          %807 = vst [vmem:[%s257 + $0x50] sm:$0xff] %v775
          %808 = vst [vmem:[%s257 + $0x58] sm:$0xff] %v776
          %809 = vst [vmem:[%s257 + $0x60] sm:$0xff] %v777
          %810 = vst [vmem:[%s257 + $0x68] sm:$0xff] %v778
          %811 = vst [vmem:[%s257 + $0x70] sm:$0xff] %v779
          %812 = vst [vmem:[%s257 + $0x78] sm:$0xff] %v780
          %813 = vst [vmem:[%s257 + $0x80] sm:$0xff] %v781
          %814 = vst [vmem:[%s257 + $0x88] sm:$0xff] %v782
          %815 = vst [vmem:[%s257 + $0x90] sm:$0xff] %v783
          %816 = vst [vmem:[%s257 + $0x98] sm:$0xff] %v784
          %817 = vst [vmem:[%s257 + $0xa0] sm:$0xff] %v785
          %818 = vst [vmem:[%s257 + $0xa8] sm:$0xff] %v786
          %819 = vst [vmem:[%s257 + $0xb0] sm:$0xff] %v787
          %820 = vst [vmem:[%s257 + $0xb8] sm:$0xff] %v788
          %821 = vst [vmem:[%s257 + $0xc0] sm:$0xff] %v789
          %822 = vst [vmem:[%s257 + $0xc8] sm:$0xff] %v790
          %823 = vst [vmem:[%s257 + $0xd0] sm:$0xff] %v791
          %824 = vst [vmem:[%s257 + $0xd8] sm:$0xff] %v792
          %825 = vst [vmem:[%s257 + $0xe0] sm:$0xff] %v793
          %826 = vst [vmem:[%s257 + $0xe8] sm:$0xff] %v794
          %827 = vst [vmem:[%s257 + $0xf0] sm:$0xff] %v795
          %828 = vst [vmem:[%s257 + $0xf8] sm:$0xff] %v796
        $region48: #{tpu_custom_call.1} parent=31 // pred_fallthru
          _
        %s829 = sand.u32 %s132, 1
        %s830 = scalar_lea.sflag [#allocation4], %s829
        %s831 = sand.u32 %s132, 1
        %s832 = smul.addr %s831, 256
        %s833 = scalar_lea.vmem [#allocation7], %s832
        // Predicated region
        $region49: #{tpu_custom_call.1} parent=31 // pred_check
          %p834 = pneg %p142
        $region50: #{tpu_custom_call.1} parent=31 // pred_check_branch
          %836 = sbr.rel (%p834) target = $region52
        $region51: #{tpu_custom_call.1} parent=31 // pred_region
          %s837 = smul.u32 32, %s26
          %s838 = ssub.s32 25, %s837
          %s839 = smul.u32 128, %s838
          %s841 = ssub.s32 4096, %s839
          %842 = vsyncadd %s830, %s841
          %p843 = scmp.ne.s32.totalorder 0, %s839
          %s844 = smul.addr %s837, 2
          %s845 = sadd.s32 %s27, %s844
          %s846 = smul.addr %s845, 128
          %s847 = scalar_lea.hbm %s3, %s846
          %s848 = smul.u32 8, %s838
          %s849 = sshll.u32 %s833, 4
          %s850 = int_to_ptr.vmem [resolvable:$true] %s849
          %s851 = sshll.u32 %s848, 4
          %855 = dma.vmem_to_hbm [thread:$0]  (%p843), %s850, %s851, %s847, %s830, 128, 256, 8
        $region52: #{tpu_custom_call.1} parent=31 // pred_fallthru
          _
      $region32: #{tpu_custom_call.1} parent=5 // pred_fallthru
        _
      %p856 = scmp.le.s32.totalorder 2, %s16
      // Predicated region
      $region53: #{tpu_custom_call.1} parent=5 // pred_check
        %p857 = pneg %p856
      $region54: #{tpu_custom_call.1} parent=5 // pred_check_branch
        %859 = sbr.rel (%p857) target = $region56
      $region55: #{tpu_custom_call.1} parent=5 // pred_region
        %s860 = ssub.s32 %s16, 2
        // Predicated region
        $region57: #{tpu_custom_call.1} parent=55 // pred_check
          %p861 = pneg %p148
        $region58: #{tpu_custom_call.1} parent=55 // pred_check_branch
          %863 = sbr.rel (%p861) target = $region60
        $region59: #{tpu_custom_call.1} parent=55 // pred_region
          %s864 = sand.u32 %s133, 1
          %s865 = scalar_lea.sflag [#allocation4], %s864
          %s866 = sand.u32 %s133, 1
          %s867 = smul.addr %s866, 256
          %s868 = scalar_lea.vmem [#allocation7], %s867
          %869 = dma.done %s865, 4096
        $region60: #{tpu_custom_call.1} parent=55 // pred_fallthru
          _
      $region56: #{tpu_custom_call.1} parent=5 // pred_fallthru
        _
    $region6: #{tpu_custom_call.1} parent=1 // loop_footer
      %s20 = sadd.s32 1, %s16
    $region7: #{tpu_custom_call.1} parent=1 // loop_footer_branch
      %15 = sbr.rel target = $region3
    $region8: #{tpu_custom_call.1} parent=1 // loop_exit
      _
    %870 = vsyncpa [#allocation3], 1
    %s871 = scalar_lea.sflag [#allocation3], 1
    %872 = vsyncpa %s871, 1
    %873 = vsyncpa [#allocation6], 1
    %s874 = scalar_lea.sflag [#allocation6], 1
    %875 = vsyncpa %s874, 1
    %876 = vsyncpa [#allocation4], 1
    %s877 = scalar_lea.sflag [#allocation4], 1
    %878 = vsyncpa %s877, 1

</llo_original>
